<compile_context>
chip_gen: v7x
topology: tpu7x:2x2x1
jax: 0.10.0
libtpu: 0.0.40
codegen_flags: <defaults>
</compile_context>

<pallas_src>
import functools
import math

import jax
import jax.numpy as jnp
from jax.experimental import pallas as pl
from jax.experimental.pallas import tpu as pltpu

EPS = 1e-9               # matches nn.BatchNorm1d(input_dim, eps=1e-09)
_MAX_FOLD_LANES = 512    # cap on folded lane width (fold * D)
_MAX_ROW_TILE = 2048


def _round_up(x, m):
    return ((x + m - 1) // m) * m


def _vmem_budgets():
    """Generation-aware scoped-VMEM limit and per-pass block budget."""
    try:
        cap = int(pltpu.get_tpu_info().vmem_capacity_bytes)
    except Exception:  # pragma: no cover - fall back to v7x-safe assumption
        cap = 64 << 20
    limit = max(32 << 20, min(cap - (8 << 20), 112 << 20))  # headroom under physical
    return limit, limit // 2


def _pick_fold(D):
    """Fold factor so fold*D is a lane-dense multiple of 128 (when affordable)."""
    if D % 128 == 0:
        return 1
    lanes = math.lcm(D, 128)
    if lanes <= _MAX_FOLD_LANES:
        return lanes // D
    # TODO(synk): pad D up to a multiple of 128 for widths (e.g. 40, 72) whose
    # lcm with 128 exceeds the fold cap; they currently fall back to masked stores.
    return 1


def _pick_lane_tile(lanes):
    if lanes % 128 != 0 or lanes <= 512:
        return lanes  # block == full array dim is always legal
    for tl in (512, 256, 128):
        if lanes % tl == 0:
            return tl
    return lanes


def _pick_row_tile(rows, lane_tile, itemsize, block_budget):
    sub = {4: 8, 2: 16, 1: 32}.get(itemsize, 8)   # sublane multiple per dtype
    per_row = lane_tile * (4 * itemsize + 8)      # 2x in + 2x out buffers + f32 temps
    tr = block_budget // max(per_row, 1)
    tr = min(tr, _MAX_ROW_TILE, _round_up(rows, sub))
    tr = max((tr // sub) * sub, sub)
    return tr


def _stats_kernel(x_ref, gamma_ref, beta_ref, a_ref, b_ref, sum_sc, sq_sc,
                  *, fold, feat, inv_n):
    """Pass 1: per-lane sum/sumsq accumulation; folded BN affine on last row step."""
    i = pl.program_id(1)  # rows axis (reduction, innermost/last grid axis)

    @pl.when(i == 0)
    def _():
        sum_sc[...] = jnp.zeros_like(sum_sc)
        sq_sc[...] = jnp.zeros_like(sq_sc)

    x = x_ref[...].astype(jnp.float32)
    sum_sc[...] += jnp.sum(x, axis=0, keepdims=True)
    sq_sc[...] += jnp.sum(x * x, axis=0, keepdims=True)

    @pl.when(i == pl.num_programs(1) - 1)
    def _():
        def fold_sum(row):
            # Sum lanes belonging to the same feature (congruent mod `feat`);
            # result stays replicated per fold group.  Cyclic rolls -> XLU slot.
            out = row
            for k in range(1, fold):
                out = out + pltpu.roll(row, shift=k * feat, axis=1)
            return out

        mean = fold_sum(sum_sc[...]) * inv_n
        ex2 = fold_sum(sq_sc[...]) * inv_n
        # TODO(synk): for extreme B*T with |mean| >> std, switch to per-tile
        # centered sums combined via Chan's formula to avoid f32 cancellation.
        var = jnp.maximum(ex2 - mean * mean, 0.0)
        inv_std = jax.lax.rsqrt(var + EPS)
        a = gamma_ref[...] * inv_std
        a_ref[...] = a
        b_ref[...] = beta_ref[...] - mean * a


def _apply_kernel(x_ref, a_ref, b_ref, alpha_ref, o_ref):
    """Pass 2: out = x * (alpha + sigmoid(x*a + b) * (1 - alpha))."""
    xf = x_ref[...].astype(jnp.float32)
    p = jax.nn.sigmoid(xf * a_ref[...] + b_ref[...])        # EUP transcendental
    alpha = alpha_ref[...]
    o_ref[...] = (xf * (alpha + p * (1.0 - alpha))).astype(o_ref.dtype)


def dice_forward(x, gamma, beta, alpha):
    """x: (B, T, D); gamma/beta/alpha: (D,).  Returns (B, T, D)."""
    B, T, D = x.shape
    N = B * T
    dtype = x.dtype
    itemsize = jnp.dtype(dtype).itemsize

    fold = _pick_fold(D)
    lanes = fold * D

    vmem_limit, block_budget = _vmem_budgets()
    tl = _pick_lane_tile(lanes)
    # The roll-based fold reduction needs the whole folded width in one lane tile.
    assert fold == 1 or tl == lanes, "folded path must not tile the lane axis"

    rows0 = pl.cdiv(N, fold)
    tr = _pick_row_tile(rows0, tl, itemsize, block_budget)
    rows = _round_up(rows0, tr)
    n_pad = rows * fold

    x2 = x.reshape(N, D)
    if n_pad != N:
        # Zero rows contribute nothing to sum/sumsq; divisor below stays the true N.
        x2 = jnp.pad(x2, ((0, n_pad - N), (0, 0)))
    x2 = x2.reshape(rows, lanes)   # contiguous row-major regrouping, no data movement

    def _prep(p):
        p = p.reshape(1, D).astype(jnp.float32)
        return jnp.tile(p, (1, fold)) if fold > 1 else p

    g2, b2, a2 = _prep(gamma), _prep(beta), _prep(alpha)

    grid = (lanes // tl, rows // tr)

    # ---- Pass 1: streaming BatchNorm statistics -> per-lane affine (a, b). ----
    a_scale, b_shift = pl.pallas_call(
        functools.partial(_stats_kernel, fold=fold, feat=D, inv_n=1.0 / N),
        out_shape=(jax.ShapeDtypeStruct((1, lanes), jnp.float32),
                   jax.ShapeDtypeStruct((1, lanes), jnp.float32)),
        grid=grid,
        in_specs=[pl.BlockSpec((tr, tl), lambda j, i: (i, j)),
                  pl.BlockSpec((1, tl), lambda j, i: (0, j)),
                  pl.BlockSpec((1, tl), lambda j, i: (0, j))],
        out_specs=(pl.BlockSpec((1, tl), lambda j, i: (0, j)),
                   pl.BlockSpec((1, tl), lambda j, i: (0, j))),
        scratch_shapes=[pltpu.VMEM((1, tl), jnp.float32),
                        pltpu.VMEM((1, tl), jnp.float32)],
        compiler_params=pltpu.CompilerParams(
            dimension_semantics=("parallel", "arbitrary"),
            vmem_limit_bytes=vmem_limit),
    )(x2, g2, b2)

    # ---- Pass 2: apply the gate, streaming row x lane tiles. ----
    out2 = pl.pallas_call(
        _apply_kernel,
        out_shape=jax.ShapeDtypeStruct((rows, lanes), dtype),
        grid=grid,
        in_specs=[pl.BlockSpec((tr, tl), lambda j, i: (i, j)),
                  pl.BlockSpec((1, tl), lambda j, i: (0, j)),
                  pl.BlockSpec((1, tl), lambda j, i: (0, j)),
                  pl.BlockSpec((1, tl), lambda j, i: (0, j))],
        out_specs=pl.BlockSpec((tr, tl), lambda j, i: (i, j)),
        compiler_params=pltpu.CompilerParams(
            dimension_semantics=("parallel", "parallel"),   # both TCs on v7x
            vmem_limit_bytes=vmem_limit),
    )(x2, a_scale, b_shift, a2)

    out = out2.reshape(n_pad, D)
    if n_pad != N:
        out = out[:N]
    return out.reshape(B, T, D)


def dice_reference(x, gamma, beta, alpha):
    """Pure-JAX reference of the PyTorch forward (training-mode BatchNorm1d)."""
    xf = x.astype(jnp.float32)
    mean = jnp.mean(xf, axis=(0, 1), keepdims=True)
    var = jnp.mean((xf - mean) ** 2, axis=(0, 1), keepdims=True)
    x_p = (xf - mean) / jnp.sqrt(var + EPS) * gamma + beta
    p = jax.nn.sigmoid(x_p)
    return (p * xf + (1.0 - p) * alpha * xf).astype(x.dtype)


def _check(key, B, T, D):
    k_x, k_g, k_b, k_a = jax.random.split(key, 4)
    x = jax.random.normal(k_x, (B, T, D), dtype=jnp.float32)
    # Module defaults are gamma=1, beta=0, alpha=0; perturb so every term matters.
    gamma = 1.0 + 0.1 * jax.random.normal(k_g, (D,), dtype=jnp.float32)
    beta = 0.1 * jax.random.normal(k_b, (D,), dtype=jnp.float32)
    alpha = 0.1 * jax.random.normal(k_a, (D,), dtype=jnp.float32)

    out = jax.block_until_ready(dice_forward(x, gamma, beta, alpha))
    ref = dice_reference(x, gamma, beta, alpha)
    assert out.shape == (B, T, D)
    assert jnp.allclose(out, ref, atol=1e-5, rtol=1e-5), (
        f"Pallas Dice mismatch vs reference for shape {(B, T, D)}"
    )


if __name__ == "__main__":
    key = jax.random.PRNGKey(0)
    k1, k2, k3, k4 = jax.random.split(key, 4)

    # Primary DIN-like case: small feature dim -> lane-folded (fold=4) path.
    _check(k1, 2, 8, 32)
    # Feature dim a multiple of 128 -> unfolded single-lane-tile path.
    _check(k2, 2, 8, 256)
    # Larger feature dim -> tiled over the lane axis (lane grid > 1).
    _check(k3, 2, 8, 1024)
    # Non-power-of-two feature dim + non-multiple row count -> generalized
    # lcm fold (fold=8) with zero-row padding.
    _check(k4, 3, 7, 48)

    print("KERNEL_OK")
</pallas_src>

<mosaic_0001>
module attributes {stable_mosaic.version = 11 : i64} {
  func.func @_stats_kernel(%arg0: i32, %arg1: i32, %arg2: memref<8x128xf32, #tpu.memory_space<vmem>>, %arg3: memref<1x128xf32, #tpu.memory_space<vmem>>, %arg4: memref<1x128xf32, #tpu.memory_space<vmem>>, %arg5: memref<1x128xf32, #tpu.memory_space<vmem>>, %arg6: memref<1x128xf32, #tpu.memory_space<vmem>>, %arg7: memref<1x128xf32, #tpu.memory_space<vmem>>, %arg8: memref<1x128xf32, #tpu.memory_space<vmem>>) attributes {dimension_semantics = [#tpu.dimension_semantics<parallel>, #tpu.dimension_semantics<arbitrary>], iteration_bounds = array<i64: 1, 1>, scalar_prefetch = 0 : i64, scratch_operands = 2 : i64, tpu.core_type = #tpu.core_type<tc>, window_params = [{transform_indices = @transform_0, window_bounds = array<i64: 8, 128>}, {transform_indices = @transform_1, window_bounds = array<i64: 1, 128>}, {transform_indices = @transform_2, window_bounds = array<i64: 1, 128>}, {transform_indices = @transform_3, window_bounds = array<i64: 1, 128>}, {transform_indices = @transform_4, window_bounds = array<i64: 1, 128>}]} {
    %c0_i32 = arith.constant 0 : i32
    %0 = arith.cmpi eq, %arg1, %c0_i32 : i32
    %1 = arith.extui %0 : i1 to i32
    %c0_i32_0 = arith.constant 0 : i32
    %2 = arith.cmpi ne, %1, %c0_i32_0 : i32
    scf.if %2 {
      %cst_13 = arith.constant 0.000000e+00 : f32
      %18 = vector.broadcast %cst_13 : f32 to vector<1x128xf32>
      %c0_14 = arith.constant 0 : index
      %c0_15 = arith.constant 0 : index
      %19 = vector.load %arg7[%c0_14, %c0_15] : memref<1x128xf32, #tpu.memory_space<vmem>>, vector<1x128xf32>
      tpu.vector_store %arg7[%c0_14, %c0_15], %18 {strides = array<i32>} : memref<1x128xf32, #tpu.memory_space<vmem>>, vector<1x128xf32>,
      %cst_16 = arith.constant 0.000000e+00 : f32
      %20 = vector.broadcast %cst_16 : f32 to vector<1x128xf32>
      %c0_17 = arith.constant 0 : index
      %c0_18 = arith.constant 0 : index
      %21 = vector.load %arg8[%c0_17, %c0_18] : memref<1x128xf32, #tpu.memory_space<vmem>>, vector<1x128xf32>
      tpu.vector_store %arg8[%c0_17, %c0_18], %20 {strides = array<i32>} : memref<1x128xf32, #tpu.memory_space<vmem>>, vector<1x128xf32>,
    } else {
    }
    %c0 = arith.constant 0 : index
    %c0_1 = arith.constant 0 : index
    %3 = vector.load %arg2[%c0, %c0_1] : memref<8x128xf32, #tpu.memory_space<vmem>>, vector<8x128xf32>
    %c0_2 = arith.constant 0 : index
    %c0_3 = arith.constant 0 : index
    %4 = vector.load %arg7[%c0_2, %c0_3] : memref<1x128xf32, #tpu.memory_space<vmem>>, vector<1x128xf32>
    %cst = arith.constant dense<0.000000e+00> : vector<128xf32>
    %5 = vector.multi_reduction <add>, %3, %cst [0] : vector<8x128xf32> to vector<128xf32>
    %6 = vector.shape_cast %5 : vector<128xf32> to vector<1x128xf32>
    %7 = arith.addf %4, %6 : vector<1x128xf32>
    %c0_4 = arith.constant 0 : index
    %c0_5 = arith.constant 0 : index
    %8 = vector.load %arg7[%c0_4, %c0_5] : memref<1x128xf32, #tpu.memory_space<vmem>>, vector<1x128xf32>
    tpu.vector_store %arg7[%c0_4, %c0_5], %7 {strides = array<i32>} : memref<1x128xf32, #tpu.memory_space<vmem>>, vector<1x128xf32>,
    %c0_6 = arith.constant 0 : index
    %c0_7 = arith.constant 0 : index
    %9 = vector.load %arg8[%c0_6, %c0_7] : memref<1x128xf32, #tpu.memory_space<vmem>>, vector<1x128xf32>
    %10 = arith.mulf %3, %3 : vector<8x128xf32>
    %cst_8 = arith.constant dense<0.000000e+00> : vector<128xf32>
    %11 = vector.multi_reduction <add>, %10, %cst_8 [0] : vector<8x128xf32> to vector<128xf32>
    %12 = vector.shape_cast %11 : vector<128xf32> to vector<1x128xf32>
    %13 = arith.addf %9, %12 : vector<1x128xf32>
    %c0_9 = arith.constant 0 : index
    %c0_10 = arith.constant 0 : index
    %14 = vector.load %arg8[%c0_9, %c0_10] : memref<1x128xf32, #tpu.memory_space<vmem>>, vector<1x128xf32>
    tpu.vector_store %arg8[%c0_9, %c0_10], %13 {strides = array<i32>} : memref<1x128xf32, #tpu.memory_space<vmem>>, vector<1x128xf32>,
    %c0_i32_11 = arith.constant 0 : i32
    %15 = arith.cmpi eq, %arg1, %c0_i32_11 : i32
    %16 = arith.extui %15 : i1 to i32
    %c0_i32_12 = arith.constant 0 : i32
    %17 = arith.cmpi ne, %16, %c0_i32_12 : i32
    scf.if %17 {
      %c0_13 = arith.constant 0 : index
      %c0_14 = arith.constant 0 : index
      %18 = vector.load %arg7[%c0_13, %c0_14] : memref<1x128xf32, #tpu.memory_space<vmem>>, vector<1x128xf32>
      %c32_i32 = arith.constant 32 : i32
      %19 = tpu.dynamic_rotate %18 by %c32_i32 dim 1 : vector<1x128xf32>, i32 -> vector<1x128xf32>
      %20 = arith.addf %18, %19 : vector<1x128xf32>
      %c64_i32 = arith.constant 64 : i32
      %21 = tpu.dynamic_rotate %18 by %c64_i32 dim 1 : vector<1x128xf32>, i32 -> vector<1x128xf32>
      %22 = arith.addf %20, %21 : vector<1x128xf32>
      %c96_i32 = arith.constant 96 : i32
      %23 = tpu.dynamic_rotate %18 by %c96_i32 dim 1 : vector<1x128xf32>, i32 -> vector<1x128xf32>
      %24 = arith.addf %22, %23 : vector<1x128xf32>
      %cst_15 = arith.constant 6.250000e-02 : f32
      %25 = vector.broadcast %cst_15 : f32 to vector<1x128xf32>
      %26 = arith.mulf %24, %25 : vector<1x128xf32>
      %c0_16 = arith.constant 0 : index
      %c0_17 = arith.constant 0 : index
      %27 = vector.load %arg8[%c0_16, %c0_17] : memref<1x128xf32, #tpu.memory_space<vmem>>, vector<1x128xf32>
      %c32_i32_18 = arith.constant 32 : i32
      %28 = tpu.dynamic_rotate %27 by %c32_i32_18 dim 1 : vector<1x128xf32>, i32 -> vector<1x128xf32>
      %29 = arith.addf %27, %28 : vector<1x128xf32>
      %c64_i32_19 = arith.constant 64 : i32
      %30 = tpu.dynamic_rotate %27 by %c64_i32_19 dim 1 : vector<1x128xf32>, i32 -> vector<1x128xf32>
      %31 = arith.addf %29, %30 : vector<1x128xf32>
      %c96_i32_20 = arith.constant 96 : i32
      %32 = tpu.dynamic_rotate %27 by %c96_i32_20 dim 1 : vector<1x128xf32>, i32 -> vector<1x128xf32>
      %33 = arith.addf %31, %32 : vector<1x128xf32>
      %cst_21 = arith.constant 6.250000e-02 : f32
      %34 = vector.broadcast %cst_21 : f32 to vector<1x128xf32>
      %35 = arith.mulf %33, %34 : vector<1x128xf32>
      %36 = arith.mulf %26, %26 : vector<1x128xf32>
      %37 = arith.subf %35, %36 : vector<1x128xf32>
      %cst_22 = arith.constant 0.000000e+00 : f32
      %38 = vector.broadcast %cst_22 : f32 to vector<1x128xf32>
      %39 = arith.maximumf %37, %38 : vector<1x128xf32>
      %cst_23 = arith.constant 9.99999971E-10 : f32
      %40 = vector.broadcast %cst_23 : f32 to vector<1x128xf32>
      %41 = arith.addf %39, %40 : vector<1x128xf32>
      %42 = math.rsqrt %41 : vector<1x128xf32>
      %c0_24 = arith.constant 0 : index
      %c0_25 = arith.constant 0 : index
      %43 = vector.load %arg3[%c0_24, %c0_25] : memref<1x128xf32, #tpu.memory_space<vmem>>, vector<1x128xf32>
      %44 = arith.mulf %43, %42 : vector<1x128xf32>
      %c0_26 = arith.constant 0 : index
      %c0_27 = arith.constant 0 : index
      %45 = vector.load %arg5[%c0_26, %c0_27] : memref<1x128xf32, #tpu.memory_space<vmem>>, vector<1x128xf32>
      tpu.vector_store %arg5[%c0_26, %c0_27], %44 {strides = array<i32>} : memref<1x128xf32, #tpu.memory_space<vmem>>, vector<1x128xf32>,
      %c0_28 = arith.constant 0 : index
      %c0_29 = arith.constant 0 : index
      %46 = vector.load %arg4[%c0_28, %c0_29] : memref<1x128xf32, #tpu.memory_space<vmem>>, vector<1x128xf32>
      %47 = arith.mulf %26, %44 : vector<1x128xf32>
      %48 = arith.subf %46, %47 : vector<1x128xf32>
      %c0_30 = arith.constant 0 : index
      %c0_31 = arith.constant 0 : index
      %49 = vector.load %arg6[%c0_30, %c0_31] : memref<1x128xf32, #tpu.memory_space<vmem>>, vector<1x128xf32>
      tpu.vector_store %arg6[%c0_30, %c0_31], %48 {strides = array<i32>} : memref<1x128xf32, #tpu.memory_space<vmem>>, vector<1x128xf32>,
    } else {
    }
    return
  }
  func.func @transform_0(%arg0: i32, %arg1: i32) -> (i32, i32) {
    %c0_i32 = arith.constant 0 : i32
    return %arg1, %arg0 : i32, i32
  }
  func.func @transform_1(%arg0: i32, %arg1: i32) -> (i32, i32) {
    %c0_i32 = arith.constant 0 : i32
    %c0_i32_0 = arith.constant 0 : i32
    return %c0_i32, %arg0 : i32, i32
  }
  func.func @transform_2(%arg0: i32, %arg1: i32) -> (i32, i32) {
    %c0_i32 = arith.constant 0 : i32
    %c0_i32_0 = arith.constant 0 : i32
    return %c0_i32, %arg0 : i32, i32
  }
  func.func @transform_3(%arg0: i32, %arg1: i32) -> (i32, i32) {
    %c0_i32 = arith.constant 0 : i32
    %c0_i32_0 = arith.constant 0 : i32
    return %c0_i32, %arg0 : i32, i32
  }
  func.func @transform_4(%arg0: i32, %arg1: i32) -> (i32, i32) {
    %c0_i32 = arith.constant 0 : i32
    %c0_i32_0 = arith.constant 0 : i32
    return %c0_i32, %arg0 : i32, i32
  }
}

</mosaic_0001>

<llo_original>
// kernel: tpu_custom_call.1
$region0: #{tpu_custom_call.1}
  #allocation0 [shape = 'u32[]', space=smem, size = 0x4, offset = 0x4, fixed_abs, tag = 'smem constant byte address 0x4 - core index']
  #allocation1 [shape = 'u32[144,128]{1,0:T(1,128)}', space=vmem, size = 0x12000, scoped, tag = 'internal scratch']
  #allocation2 [shape = 'f32[1,128]{1,0:T(1,128)}', space=vmem, size = 0x200, scoped, tag = 'scratch operand']
  #allocation3 [shape = 'f32[1,128]{1,0:T(1,128)}', space=vmem, size = 0x200, scoped, tag = 'scratch operand']
  %s0 = inlined_call_operand.hbm [shape: f32[8,128], index: 0, kind: input, shape index: {}]
  %s1 = inlined_call_operand.vmem [shape: f32[1,128], index: 1, kind: input, shape index: {}]
  %s2 = inlined_call_operand.vmem [shape: f32[1,128], index: 2, kind: input, shape index: {}]
  %s3 = inlined_call_operand.hbm [shape: f32[1,128], index: 3, kind: output, shape index: {0}]
  %s4 = inlined_call_operand.hbm [shape: f32[1,128], index: 4, kind: output, shape index: {1}]
  %5 = xla_tuple %s3, %s4
  %s6 = sld [smem:[#allocation0]]
  $region42: #{tpu_custom_call.1} parent=0
    _
  %s8 = ssub.s32 1, %s6
  %s9 = scalar_select 0, %s8, %s6
  $region1: #{tpu_custom_call.1} parent=0
    #allocation4 [shape = 'u8[4096]{0}', space=vmem, size = 0x1000, scoped, tag = 'input window, operand 0, single buffered']
    #allocation5 [shape = 's32[1]{0}', space=sflag, size = 0x4, scoped, tag = 'scoped memory for tpu_custom_call.1']
    #allocation6 [shape = 's32[1]{0}', space=sflag, size = 0x4, scoped, tag = 'scoped memory for tpu_custom_call.1']
    #allocation7 [shape = 'u8[512]{0}', space=vmem, size = 0x400, scoped, tag = 'output window, operand 0, single buffered']
    #allocation8 [shape = 'u8[512]{0}', space=vmem, size = 0x400, scoped, tag = 'output window, operand 1, single buffered']
    #allocation9 [shape = 's32[1]{0}', space=sflag, size = 0x4, scoped, tag = 'scoped memory for tpu_custom_call.1']
    %10 = vsyncpa [#allocation5], 0
    %11 = vsyncpa [#allocation6], 0
    %12 = vsyncpa [#allocation9], 0
    // Predicated region
    $region2: #{tpu_custom_call.1} parent=1 // pred_check
      _
    $region3: #{tpu_custom_call.1} parent=1 // pred_check_branch
      %14 = sbr.rel (0) target = $region5
    $region4: #{tpu_custom_call.1} parent=1 // pred_region
      %s16 = ssub.s32 128, 128
      %17 = vsyncadd [#allocation5], %s16
      %s19 = sshll.u32 [#allocation4], 4
      %s20 = int_to_ptr.vmem [resolvable:$true] %s19
      %22 = dma.hbm_to_vmem [thread:$0]  %s0, 128, %s20, [#allocation5]
    $region5: #{tpu_custom_call.1} parent=1 // pred_fallthru
      _
    // Predicated region
    $region6: #{tpu_custom_call.1} parent=1 // pred_check
      _
    $region7: #{tpu_custom_call.1} parent=1 // pred_check_branch
      %24 = sbr.rel (0) target = $region9
    $region8: #{tpu_custom_call.1} parent=1 // pred_region
      _
    $region9: #{tpu_custom_call.1} parent=1 // pred_fallthru
      _
    // Predicated region
    $region10: #{tpu_custom_call.1} parent=1 // pred_check
      _
    $region11: #{tpu_custom_call.1} parent=1 // pred_check_branch
      %26 = sbr.rel (0) target = $region13
    $region12: #{tpu_custom_call.1} parent=1 // pred_region
      _
    $region13: #{tpu_custom_call.1} parent=1 // pred_fallthru
      _
    // Predicated region
    $region14: #{tpu_custom_call.1} parent=1 // pred_check
      _
    $region15: #{tpu_custom_call.1} parent=1 // pred_check_branch
      %28 = sbr.rel (0) target = $region17
    $region16: #{tpu_custom_call.1} parent=1 // pred_region
      %29 = dma.done [#allocation5], 128
    $region17: #{tpu_custom_call.1} parent=1 // pred_fallthru
      _
    %p30 = scmp.eq.s32.totalorder 0, 0
    // Predicated region
    $region18: #{tpu_custom_call.1} parent=1 // pred_check
      %p31 = pneg %p30
    $region19: #{tpu_custom_call.1} parent=1 // pred_check_branch
      %33 = sbr.rel (%p31) target = $region21
    $region20: #{tpu_custom_call.1} parent=1 // pred_region
      %34 = vst [vmem:[#allocation2] sm:$0x1] 0.0
      %35 = vst [vmem:[#allocation3] sm:$0x1] 0.0
    $region21: #{tpu_custom_call.1} parent=1 // pred_fallthru
      _
    %v36 = vld [vmem:[#allocation4] sm:$0xff]
    %v37 = vld [vmem:[#allocation2] sm:$0x1]
    %v38 = vrot.slane %v36, 4
    %v39 = vadd.f32 %v36, %v38
    %v40 = vrot.slane %v39, 2
    %v41 = vadd.f32 %v39, %v40
    %v42 = vrot.slane %v41, 1
    %v43 = vadd.f32 %v41, %v42
    %v44 = vadd.f32 %v37, %v43
    %45 = vst [vmem:[#allocation2] sm:$0x1] %v44
    %v46 = vld [vmem:[#allocation3] sm:$0x1]
    %v47 = vmul.f32 %v36, %v36
    %v48 = vrot.slane %v47, 4
    %v49 = vadd.f32 %v47, %v48
    %v50 = vrot.slane %v49, 2
    %v51 = vadd.f32 %v49, %v50
    %v52 = vrot.slane %v51, 1
    %v53 = vadd.f32 %v51, %v52
    %v54 = vadd.f32 %v46, %v53
    %55 = vst [vmem:[#allocation3] sm:$0x1] %v54
    // Predicated region
    $region22: #{tpu_custom_call.1} parent=1 // pred_check
      %p56 = pneg %p30
    $region23: #{tpu_custom_call.1} parent=1 // pred_check_branch
      %58 = sbr.rel (%p56) target = $region25
    $region24: #{tpu_custom_call.1} parent=1 // pred_region
      %v59 = vld [vmem:[#allocation2] sm:$0x1]
      %60 = vrot.lane.b32.xlu0 %v59, 32
      %v61 = vpop.permute.xlu0 %60
      %v62 = vadd.f32 %v59, %v61
      %63 = vrot.lane.b32.xlu0 %v59, 64
      %v64 = vpop.permute.xlu0 %63
      %v65 = vadd.f32 %v62, %v64
      %66 = vrot.lane.b32.xlu0 %v59, 96
      %v67 = vpop.permute.xlu0 %66
      %v68 = vadd.f32 %v65, %v67
      %v69 = vmul.f32 %v68, 0.0625
      %v70 = vld [vmem:[#allocation3] sm:$0x1]
      %71 = vrot.lane.b32.xlu0 %v70, 32
      %v72 = vpop.permute.xlu0 %71
      %v73 = vadd.f32 %v70, %v72
      %74 = vrot.lane.b32.xlu0 %v70, 64
      %v75 = vpop.permute.xlu0 %74
      %v76 = vadd.f32 %v73, %v75
      %77 = vrot.lane.b32.xlu0 %v70, 96
      %v78 = vpop.permute.xlu0 %77
      %v79 = vadd.f32 %v76, %v78
      %v80 = vmul.f32 %v79, 0.0625
      %v81 = vmul.f32 %v69, %v69
      %v82 = vsub.f32 %v80, %v81
      %v83 = vmax.f32 %v82, 0.0
      %v84 = vadd.f32 %v83, 1e-09
      %v85 = vrsqrt.pop %v84
      %v86 = vld [vmem:[%s1] sm:$0x1]
      %v87 = vmul.f32 %v86, %v85
      %88 = vst [vmem:[#allocation7] sm:$0x1] %v87
      %v89 = vld [vmem:[%s2] sm:$0x1]
      %v90 = vmul.f32 %v69, %v87
      %v91 = vsub.f32 %v89, %v90
      %92 = vst [vmem:[#allocation8] sm:$0x1] %v91
    $region25: #{tpu_custom_call.1} parent=1 // pred_fallthru
      _
    // Predicated region
    $region26: #{tpu_custom_call.1} parent=1 // pred_check
      _
    $region27: #{tpu_custom_call.1} parent=1 // pred_check_branch
      %94 = sbr.rel (0) target = $region29
    $region28: #{tpu_custom_call.1} parent=1 // pred_region
      %s96 = ssub.s32 16, 16
      %97 = vsyncadd [#allocation6], %s96
      %s99 = sshll.u32 [#allocation7], 4
      %s100 = int_to_ptr.vmem [resolvable:$true] %s99
      %102 = dma.vmem_to_hbm [thread:$0]  %s100, 16, %s3, [#allocation6]
    $region29: #{tpu_custom_call.1} parent=1 // pred_fallthru
      _
    // Predicated region
    $region30: #{tpu_custom_call.1} parent=1 // pred_check
      _
    $region31: #{tpu_custom_call.1} parent=1 // pred_check_branch
      %104 = sbr.rel (0) target = $region33
    $region32: #{tpu_custom_call.1} parent=1 // pred_region
      %s106 = ssub.s32 16, 16
      %107 = vsyncadd [#allocation9], %s106
      %s109 = sshll.u32 [#allocation8], 4
      %s110 = int_to_ptr.vmem [resolvable:$true] %s109
      %112 = dma.vmem_to_hbm [thread:$0]  %s110, 16, %s4, [#allocation9]
    $region33: #{tpu_custom_call.1} parent=1 // pred_fallthru
      _
    // Predicated region
    $region34: #{tpu_custom_call.1} parent=1 // pred_check
      _
    $region35: #{tpu_custom_call.1} parent=1 // pred_check_branch
      %114 = sbr.rel (0) target = $region37
    $region36: #{tpu_custom_call.1} parent=1 // pred_region
      %115 = dma.done [#allocation6], 16
    $region37: #{tpu_custom_call.1} parent=1 // pred_fallthru
      _
    // Predicated region
    $region38: #{tpu_custom_call.1} parent=1 // pred_check
      _
    $region39: #{tpu_custom_call.1} parent=1 // pred_check_branch
      %117 = sbr.rel (0) target = $region41
    $region40: #{tpu_custom_call.1} parent=1 // pred_region
      %118 = dma.done [#allocation9], 16
    $region41: #{tpu_custom_call.1} parent=1 // pred_fallthru
      _
    %119 = vsyncpa [#allocation5], 1
    %120 = vsyncpa [#allocation6], 1
    %121 = vsyncpa [#allocation9], 1

</llo_original>
